<compile_context>
chip_gen: v7x
topology: tpu7x:2x2x1
jax: 0.10.0
libtpu: 0.0.40
codegen_flags: <defaults>
</compile_context>

<pallas_src>
import functools

import jax
import jax.numpy as jnp
from jax import lax
from jax.experimental import pallas as pl
from jax.experimental.pallas import tpu as pltpu

# Synthetic env dims (stand-ins for env.observation_space / env.action_space).
NUM_STATES = 4
# NOTE: the PyTorch module only type-checks when NUM_ACTIONS == 5, because
# `self.out = nn.Linear(5, NUM_ACTIONS)` is applied to y = V + A - A.mean(),
# and y has NUM_ACTIONS features.  So we use NUM_ACTIONS = 5.
NUM_ACTIONS = 5
HIDDEN = 5
BATCH = 2

TILE_B = 128    # batch (sublane) tile: 128 = v5e MXU height; 256 ok on v6e/v7x
PAD_IN = 16     # fan-in padding: holds the concatenated [V | A | 1] activations
PAD_F = 128     # lane padding for every layer output (lane-dense stores)
N_FUSED = 5     # fc1, fc2, (value_1|advantage_1), (advantage_2|value_2), out
A_OFF = 8       # lane offset of the advantage path inside fused activations
V2_COL = 8      # lane of the fused layer-3 output that carries the V2 scalar
ONE_COL = 15    # lane carrying the constant 1 used for bias folding


def _tile_forward(x_tile, w_ref):
    """Shared per-tile body: 5 fused MXU dots + masked A-sum (VPU/XLU)."""

    def linear(h16, i):
        # Biases are folded into row ONE_COL of each packed weight; padded
        # rows/cols are zero, so padded lanes never contaminate real outputs.
        return jnp.dot(h16, w_ref[i], preferred_element_type=jnp.float32)

    h = jax.nn.relu(linear(x_tile, 0))             # FULLY_CONNECTED_LAYER_1 + relu
    h = jax.nn.relu(linear(h[:, :PAD_IN], 1))      # FULLY_CONNECTED_LAYER_2 + relu
    t = jax.nn.relu(linear(h[:, :PAD_IN], 2))      # fused value_1 | advantage_1 (+relu)
    t = jax.nn.relu(linear(t[:, :PAD_IN], 3))      # fused advantage_2 | value_2 (+relu)
    # t layout: lanes [0, NUM_ACTIONS) = A (post-relu), lane V2_COL = V2
    # (post-relu), lane ONE_COL = 1 for real rows; padded batch rows are all 0.

    # Partial sum for the torch-style *global* A.mean(): mask is lane-only
    # because padded rows are exactly zero (their constant-1 lane is 0).
    # This reduce runs on VPU+XLU, off the MXU critical path.
    cols = lax.broadcasted_iota(jnp.int32, t.shape, 1)
    a_sum = jnp.sum(jnp.where(cols < NUM_ACTIONS, t, 0.0))

    # Final `out` layer with the V broadcast + bias folded into the weight:
    #   y @ Wo + bo == A @ Wo + V * s + bo - mean * s,  s = column sums of Wo,
    # where row V2_COL of W4 holds s and row ONE_COL holds bo.  The matmul
    # therefore does not depend on the mean reduction at all.
    out_raw = jnp.dot(t[:, :PAD_IN], w_ref[4], preferred_element_type=jnp.float32)
    return out_raw, a_sum


def dueling_dqn_kernel_onetile(x_ref, w_ref, out_ref, *, batch):
    """Single batch tile: mean fix-up stays fully in-kernel (cheap VPU op)."""
    out_raw, a_sum = _tile_forward(x_ref[...], w_ref)
    a_mean = a_sum * (1.0 / float(batch * NUM_ACTIONS))
    s_row = w_ref[4][V2_COL:V2_COL + 1, :]          # (1, PAD_F): col sums of Wo
    out_ref[...] = out_raw - a_mean * s_row


def dueling_dqn_kernel_tiled(x_ref, w_ref, out_ref, asum_ref):
    """Multi-tile path: emit raw output + per-tile partial A-sum; the global
    mean fix-up (couples all tiles) is a tiny fused epilogue in the wrapper."""
    out_raw, a_sum = _tile_forward(x_ref[...], w_ref)
    out_ref[...] = out_raw
    asum_ref[...] = jnp.full(asum_ref.shape, a_sum, dtype=jnp.float32)


def make_params(key):
    """Deterministic params mimicking nn.Linear default U(-1/sqrt(fan_in), +)."""
    dims = [
        (NUM_STATES, HIDDEN),   # FULLY_CONNECTED_LAYER_1
        (HIDDEN, HIDDEN),       # FULLY_CONNECTED_LAYER_2
        (HIDDEN, HIDDEN),       # value_1
        (HIDDEN, 1),            # value_2
        (HIDDEN, HIDDEN),       # advantage_1
        (HIDDEN, NUM_ACTIONS),  # advantage_2
        (HIDDEN, NUM_ACTIONS),  # out
    ]
    raw = []
    for i, (fan_in, fan_out) in enumerate(dims):
        kw, kb = jax.random.split(jax.random.fold_in(key, i))
        bound = 1.0 / (fan_in ** 0.5)
        w = jax.random.uniform(kw, (fan_in, fan_out), jnp.float32, -bound, bound)
        b = jax.random.uniform(kb, (fan_out,), jnp.float32, -bound, bound)
        raw.append((w, b))
    return raw   # unpadded (fan_in, fan_out) weights + (fan_out,) biases


def pack_params(raw):
    """Pack the 7 torch layers into 5 fused (PAD_IN, PAD_F) weights.

    Biases are folded in via the constant-1 lane (row/lane ONE_COL); the V
    broadcast of the dueling head is folded into the final weight
    (row V2_COL = column sums of Wo)."""
    (w1, b1), (w2, b2), (wv1, bv1), (wv2, bv2), (wa1, ba1), (wa2, ba2), (wo, bo) = raw

    ws = [jnp.zeros((PAD_IN, PAD_F), jnp.float32) for _ in range(N_FUSED)]

    # layer 0: FULLY_CONNECTED_LAYER_1, outputs in lanes [0, HIDDEN).
    ws[0] = ws[0].at[:NUM_STATES, :HIDDEN].set(w1)
    ws[0] = ws[0].at[ONE_COL, :HIDDEN].set(b1)
    ws[0] = ws[0].at[ONE_COL, ONE_COL].set(1.0)

    # layer 1: FULLY_CONNECTED_LAYER_2.
    ws[1] = ws[1].at[:HIDDEN, :HIDDEN].set(w2)
    ws[1] = ws[1].at[ONE_COL, :HIDDEN].set(b2)
    ws[1] = ws[1].at[ONE_COL, ONE_COL].set(1.0)

    # layer 2: fused heads — value_1 -> lanes [0, HIDDEN),
    #                        advantage_1 -> lanes [A_OFF, A_OFF + HIDDEN).
    ws[2] = ws[2].at[:HIDDEN, :HIDDEN].set(wv1)
    ws[2] = ws[2].at[:HIDDEN, A_OFF:A_OFF + HIDDEN].set(wa1)
    ws[2] = ws[2].at[ONE_COL, :HIDDEN].set(bv1)
    ws[2] = ws[2].at[ONE_COL, A_OFF:A_OFF + HIDDEN].set(ba1)
    ws[2] = ws[2].at[ONE_COL, ONE_COL].set(1.0)

    # layer 3: block-diagonal fuse — advantage_2: rows [A_OFF,..) -> lanes [0, NUM_ACTIONS),
    #                                value_2:     rows [0, HIDDEN) -> lane V2_COL.
    ws[3] = ws[3].at[A_OFF:A_OFF + HIDDEN, :NUM_ACTIONS].set(wa2)
    ws[3] = ws[3].at[:HIDDEN, V2_COL:V2_COL + 1].set(wv2)
    ws[3] = ws[3].at[ONE_COL, :NUM_ACTIONS].set(ba2)
    ws[3] = ws[3].at[ONE_COL, V2_COL].set(bv2[0])
    ws[3] = ws[3].at[ONE_COL, ONE_COL].set(1.0)

    # layer 4: `out`, with V broadcast (row V2_COL = col sums of wo) and bias folded.
    ws[4] = ws[4].at[:HIDDEN, :NUM_ACTIONS].set(wo)
    ws[4] = ws[4].at[V2_COL, :NUM_ACTIONS].set(jnp.sum(wo, axis=0))
    ws[4] = ws[4].at[ONE_COL, :NUM_ACTIONS].set(bo)

    return jnp.stack(ws)   # (5, 16, 128) f32  (= 40 KiB, stays VMEM-resident)


@functools.partial(jax.jit, static_argnames=("tile_b",))
def dueling_dqn_forward(x, w_stack, tile_b=TILE_B):
    b, ns = x.shape
    nbt = max(1, pl.cdiv(b, tile_b))
    b_pad = nbt * tile_b

    # Zero-pad the batch to a multiple of the tile and set the constant-1
    # lane for real rows only (padded rows then stay exactly zero through the
    # whole network).  These zeros + update-slices fuse into the dispatch
    # path; no separate HBM round-trip is introduced.
    x_pad = jnp.zeros((b_pad, PAD_IN), jnp.float32)
    x_pad = x_pad.at[:b, :ns].set(x.astype(jnp.float32))
    x_pad = x_pad.at[:b, ONE_COL].set(1.0)

    in_specs = [
        pl.BlockSpec((tile_b, PAD_IN), lambda i: (i, 0)),
        # Constant index_map over the batch grid -> weights stay VMEM-resident.
        pl.BlockSpec((N_FUSED, PAD_IN, PAD_F), lambda i: (0, 0, 0)),
    ]
    compiler_params = pltpu.CompilerParams(dimension_semantics=("parallel",))

    if nbt == 1:
        # Common / test case (batch <= tile_b): single tile, global mean is
        # the per-tile mean, fix-up stays in-kernel.
        out_pad = pl.pallas_call(
            functools.partial(dueling_dqn_kernel_onetile, batch=b),
            grid=(nbt,),
            out_shape=jax.ShapeDtypeStruct((b_pad, PAD_F), jnp.float32),
            in_specs=in_specs,
            out_specs=pl.BlockSpec((tile_b, PAD_F), lambda i: (i, 0)),
            compiler_params=compiler_params,
        )(x_pad, w_stack)
        return out_pad[:b, :NUM_ACTIONS]

    # Batched case: "parallel" grid over batch tiles (megacore on v7x); the
    # cross-tile global A.mean() fix-up is a tiny fused epilogue here.
    out_pad, asum = pl.pallas_call(
        dueling_dqn_kernel_tiled,
        grid=(nbt,),
        out_shape=(
            jax.ShapeDtypeStruct((b_pad, PAD_F), jnp.float32),
            jax.ShapeDtypeStruct((nbt, 8, PAD_F), jnp.float32),
        ),
        in_specs=in_specs,
        out_specs=(
            pl.BlockSpec((tile_b, PAD_F), lambda i: (i, 0)),
            pl.BlockSpec((1, 8, PAD_F), lambda i: (i, 0, 0)),
        ),
        compiler_params=compiler_params,
    )(x_pad, w_stack)

    a_mean = jnp.sum(asum[:, 0, 0]) * (1.0 / float(b * NUM_ACTIONS))
    s = w_stack[4, V2_COL, :NUM_ACTIONS]       # column sums of Wo
    return out_pad[:b, :NUM_ACTIONS] - a_mean * s


def reference_forward(x, raw_params):
    (w1, b1), (w2, b2), (wv1, bv1), (wv2, bv2), (wa1, ba1), (wa2, ba2), (wo, bo) = raw_params
    h = jax.nn.relu(x @ w1 + b1)
    h = jax.nn.relu(h @ w2 + b2)
    v = jax.nn.relu(h @ wv1 + bv1)
    v = jax.nn.relu(v @ wv2 + bv2)               # (B, 1)
    a = jax.nn.relu(h @ wa1 + ba1)
    a = jax.nn.relu(a @ wa2 + ba2)               # (B, NUM_ACTIONS)
    y = v + a - jnp.mean(a)                      # global scalar mean (per the module)
    return y @ wo + bo


if __name__ == "__main__":
    key = jax.random.PRNGKey(0)
    k_params, k_x, k_xb = jax.random.split(key, 3)
    raw = make_params(k_params)
    w_stack = pack_params(raw)

    # Small test (batch=2): single batch tile, mean fix-up in-kernel.
    x = jax.random.normal(k_x, (BATCH, NUM_STATES), jnp.float32)
    out = dueling_dqn_forward(x, w_stack)
    jax.block_until_ready(out)
    ref = reference_forward(x, raw)
    assert out.shape == (BATCH, NUM_ACTIONS)
    assert jnp.allclose(out, ref, rtol=1e-3, atol=1e-3), (out, ref)

    # Batched check (3 tiles of 128, last tile partial): exercises the
    # parallel batch grid + cross-tile global A.mean() path.
    xb = jax.random.normal(k_xb, (300, NUM_STATES), jnp.float32)
    outb = dueling_dqn_forward(xb, w_stack)
    jax.block_until_ready(outb)
    refb = reference_forward(xb, raw)
    assert outb.shape == (300, NUM_ACTIONS)
    assert jnp.allclose(outb, refb, rtol=1e-3, atol=1e-3)

    print("KERNEL_OK")
</pallas_src>

<mosaic_0001>
module attributes {stable_mosaic.version = 11 : i64} {
  func.func @dueling_dqn_kernel_onetile(%arg0: i32, %arg1: memref<128x16xf32, #tpu.memory_space<vmem>>, %arg2: memref<5x16x128xf32, #tpu.memory_space<vmem>>, %arg3: memref<128x128xf32, #tpu.memory_space<vmem>>) attributes {dimension_semantics = [#tpu.dimension_semantics<parallel>], iteration_bounds = array<i64: 1>, scalar_prefetch = 0 : i64, scratch_operands = 0 : i64, tpu.core_type = #tpu.core_type<tc>, window_params = [{transform_indices = @transform_0, window_bounds = array<i64: 128, 16>}, {pipeline_mode = #tpu.pipeline_mode<synchronous>, transform_indices = @transform_1, window_bounds = array<i64: 5, 16, 128>}, {transform_indices = @transform_2, window_bounds = array<i64: 128, 128>}]} {
    %c0 = arith.constant 0 : index
    %c0_0 = arith.constant 0 : index
    %0 = vector.load %arg1[%c0, %c0_0] : memref<128x16xf32, #tpu.memory_space<vmem>>, vector<128x16xf32>
    %c0_1 = arith.constant 0 : index
    %c0_2 = arith.constant 0 : index
    %c0_3 = arith.constant 0 : index
    %1 = vector.load %arg2[%c0_1, %c0_2, %c0_3] : memref<5x16x128xf32, #tpu.memory_space<vmem>>, vector<1x16x128xf32>
    %2 = vector.shape_cast %1 : vector<1x16x128xf32> to vector<16x128xf32>
    %cst = arith.constant dense<0.000000e+00> : vector<128x128xf32>
    %3 = tpu.matmul %0, %2, %cst {dimension_numbers = #tpu.dot_dimension_numbers<[1], [0], [0], [1], [0, 0, 1, 1], [], []>} : vector<128x16xf32>, vector<16x128xf32>, vector<128x128xf32> -> vector<128x128xf32>
    %cst_4 = arith.constant 0.000000e+00 : f32
    %4 = vector.broadcast %cst_4 : f32 to vector<128x128xf32>
    %5 = arith.maximumf %3, %4 : vector<128x128xf32>
    %6 = vector.extract_strided_slice %5 {offsets = [0, 0], sizes = [128, 16], strides = [1, 1]} : vector<128x128xf32> to vector<128x16xf32>
    %c1 = arith.constant 1 : index
    %c0_5 = arith.constant 0 : index
    %c0_6 = arith.constant 0 : index
    %7 = vector.load %arg2[%c1, %c0_5, %c0_6] : memref<5x16x128xf32, #tpu.memory_space<vmem>>, vector<1x16x128xf32>
    %8 = vector.shape_cast %7 : vector<1x16x128xf32> to vector<16x128xf32>
    %cst_7 = arith.constant dense<0.000000e+00> : vector<128x128xf32>
    %9 = tpu.matmul %6, %8, %cst_7 {dimension_numbers = #tpu.dot_dimension_numbers<[1], [0], [0], [1], [0, 0, 1, 1], [], []>} : vector<128x16xf32>, vector<16x128xf32>, vector<128x128xf32> -> vector<128x128xf32>
    %cst_8 = arith.constant 0.000000e+00 : f32
    %10 = vector.broadcast %cst_8 : f32 to vector<128x128xf32>
    %11 = arith.maximumf %9, %10 : vector<128x128xf32>
    %12 = vector.extract_strided_slice %11 {offsets = [0, 0], sizes = [128, 16], strides = [1, 1]} : vector<128x128xf32> to vector<128x16xf32>
    %c2 = arith.constant 2 : index
    %c0_9 = arith.constant 0 : index
    %c0_10 = arith.constant 0 : index
    %13 = vector.load %arg2[%c2, %c0_9, %c0_10] : memref<5x16x128xf32, #tpu.memory_space<vmem>>, vector<1x16x128xf32>
    %14 = vector.shape_cast %13 : vector<1x16x128xf32> to vector<16x128xf32>
    %cst_11 = arith.constant dense<0.000000e+00> : vector<128x128xf32>
    %15 = tpu.matmul %12, %14, %cst_11 {dimension_numbers = #tpu.dot_dimension_numbers<[1], [0], [0], [1], [0, 0, 1, 1], [], []>} : vector<128x16xf32>, vector<16x128xf32>, vector<128x128xf32> -> vector<128x128xf32>
    %cst_12 = arith.constant 0.000000e+00 : f32
    %16 = vector.broadcast %cst_12 : f32 to vector<128x128xf32>
    %17 = arith.maximumf %15, %16 : vector<128x128xf32>
    %18 = vector.extract_strided_slice %17 {offsets = [0, 0], sizes = [128, 16], strides = [1, 1]} : vector<128x128xf32> to vector<128x16xf32>
    %c3 = arith.constant 3 : index
    %c0_13 = arith.constant 0 : index
    %c0_14 = arith.constant 0 : index
    %19 = vector.load %arg2[%c3, %c0_13, %c0_14] : memref<5x16x128xf32, #tpu.memory_space<vmem>>, vector<1x16x128xf32>
    %20 = vector.shape_cast %19 : vector<1x16x128xf32> to vector<16x128xf32>
    %cst_15 = arith.constant dense<0.000000e+00> : vector<128x128xf32>
    %21 = tpu.matmul %18, %20, %cst_15 {dimension_numbers = #tpu.dot_dimension_numbers<[1], [0], [0], [1], [0, 0, 1, 1], [], []>} : vector<128x16xf32>, vector<16x128xf32>, vector<128x128xf32> -> vector<128x128xf32>
    %cst_16 = arith.constant 0.000000e+00 : f32
    %22 = vector.broadcast %cst_16 : f32 to vector<128x128xf32>
    %23 = arith.maximumf %21, %22 : vector<128x128xf32>
    %24 = tpu.iota {dimensions = array<i32: 1>} : vector<128x128xi32>
    %c5_i32 = arith.constant 5 : i32
    %25 = vector.broadcast %c5_i32 : i32 to vector<128x128xi32>
    %26 = arith.cmpi slt, %24, %25 : vector<128x128xi32>
    %cst_17 = arith.constant 0.000000e+00 : f32
    %27 = vector.broadcast %cst_17 : f32 to vector<128x128xf32>
    %28 = arith.select %26, %23, %27 : vector<128x128xi1>, vector<128x128xf32>
    %29 = vector.shape_cast %28 : vector<128x128xf32> to vector<1x128x128xf32>
    %cst_18 = arith.constant dense<0.000000e+00> : vector<1xf32>
    %30 = vector.multi_reduction <add>, %29, %cst_18 [1, 2] : vector<1x128x128xf32> to vector<1xf32>
    %31 = vector.shape_cast %30 : vector<1xf32> to vector<1x1x1xf32>
    %32 = vector.extract %31[0, 0, 0] : f32 from vector<1x1x1xf32>
    %33 = vector.extract_strided_slice %23 {offsets = [0, 0], sizes = [128, 16], strides = [1, 1]} : vector<128x128xf32> to vector<128x16xf32>
    %c4 = arith.constant 4 : index
    %c0_19 = arith.constant 0 : index
    %c0_20 = arith.constant 0 : index
    %34 = vector.load %arg2[%c4, %c0_19, %c0_20] : memref<5x16x128xf32, #tpu.memory_space<vmem>>, vector<1x16x128xf32>
    %35 = vector.shape_cast %34 : vector<1x16x128xf32> to vector<16x128xf32>
    %cst_21 = arith.constant dense<0.000000e+00> : vector<128x128xf32>
    %36 = tpu.matmul %33, %35, %cst_21 {dimension_numbers = #tpu.dot_dimension_numbers<[1], [0], [0], [1], [0, 0, 1, 1], [], []>} : vector<128x16xf32>, vector<16x128xf32>, vector<128x128xf32> -> vector<128x128xf32>
    %cst_22 = arith.constant 1.000000e-01 : f32
    %37 = arith.mulf %32, %cst_22 : f32
    %c4_23 = arith.constant 4 : index
    %c0_24 = arith.constant 0 : index
    %c0_25 = arith.constant 0 : index
    %38 = vector.load %arg2[%c4_23, %c0_24, %c0_25] : memref<5x16x128xf32, #tpu.memory_space<vmem>>, vector<1x16x128xf32>
    %39 = vector.shape_cast %38 : vector<1x16x128xf32> to vector<16x128xf32>
    %40 = vector.extract_strided_slice %39 {offsets = [8, 0], sizes = [1, 128], strides = [1, 1]} : vector<16x128xf32> to vector<1x128xf32>
    %41 = vector.broadcast %37 : f32 to vector<1x128xf32>
    %42 = arith.mulf %41, %40 : vector<1x128xf32>
    %43 = vector.broadcast %42 : vector<1x128xf32> to vector<128x128xf32>
    %44 = arith.subf %36, %43 : vector<128x128xf32>
    %c0_26 = arith.constant 0 : index
    %c0_27 = arith.constant 0 : index
    %45 = vector.load %arg3[%c0_26, %c0_27] : memref<128x128xf32, #tpu.memory_space<vmem>>, vector<128x128xf32>
    tpu.vector_store %arg3[%c0_26, %c0_27], %44 {strides = array<i32>} : memref<128x128xf32, #tpu.memory_space<vmem>>, vector<128x128xf32>,
    return
  }
  func.func @transform_0(%arg0: i32) -> (i32, i32) {
    %c0_i32 = arith.constant 0 : i32
    %c0_i32_0 = arith.constant 0 : i32
    return %arg0, %c0_i32 : i32, i32
  }
  func.func @transform_1(%arg0: i32) -> (i32, i32, i32) {
    %c0_i32 = arith.constant 0 : i32
    %c0_i32_0 = arith.constant 0 : i32
    %c0_i32_1 = arith.constant 0 : i32
    %c0_i32_2 = arith.constant 0 : i32
    return %c0_i32, %c0_i32_0, %c0_i32_1 : i32, i32, i32
  }
  func.func @transform_2(%arg0: i32) -> (i32, i32) {
    %c0_i32 = arith.constant 0 : i32
    %c0_i32_0 = arith.constant 0 : i32
    return %arg0, %c0_i32 : i32, i32
  }
}

</mosaic_0001>

<llo_original>
// kernel: dueling_dqn_forward.1
$region0: #{dueling_dqn_forward.1}
  #allocation0 [shape = 'u32[]', space=smem, size = 0x4, offset = 0x4, fixed_abs, tag = 'smem constant byte address 0x4 - core index']
  #allocation1 [shape = 'u32[144,128]{1,0:T(1,128)}', space=vmem, size = 0x12000, scoped, tag = 'internal scratch']
  %s0 = inlined_call_operand.vmem [shape: f32[128,16], index: 0, kind: input, shape index: {}]
  %s1 = inlined_call_operand.vmem [shape: f32[5,16,128], index: 1, kind: input, shape index: {}]
  %s2 = inlined_call_operand.vmem [shape: f32[128,128], index: 2, kind: output, shape index: {}]
  %s3 = sld [smem:[#allocation0]]
  $region18: #{dueling_dqn_forward.1} parent=0
    _
  %s5 = ssub.s32 1, %s3
  %s6 = scalar_select 0, %s5, %s3
  // Predicated region
  $region2: #{dueling_dqn_forward.1} parent=0 // pred_check
    _
  $region3: #{dueling_dqn_forward.1} parent=0 // pred_check_branch
    %8 = sbr.rel (0) target = $region5
  $region4: #{dueling_dqn_forward.1} parent=0 // pred_region
    _
  $region5: #{dueling_dqn_forward.1} parent=0 // pred_fallthru
    _
  // Predicated region
  $region6: #{dueling_dqn_forward.1} parent=0 // pred_check
    _
  $region7: #{dueling_dqn_forward.1} parent=0 // pred_check_branch
    %10 = sbr.rel (0) target = $region9
  $region8: #{dueling_dqn_forward.1} parent=0 // pred_region
    _
  $region9: #{dueling_dqn_forward.1} parent=0 // pred_fallthru
    _
  %v11 = vld [vmem:[%s0] sm:$0xff]
  %v12 = vld [vmem:[%s0 + $0x8] sm:$0xff]
  %v13 = vld [vmem:[%s0 + $0x10] sm:$0xff]
  %v14 = vld [vmem:[%s0 + $0x18] sm:$0xff]
  %v15 = vld [vmem:[%s0 + $0x20] sm:$0xff]
  %v16 = vld [vmem:[%s0 + $0x28] sm:$0xff]
  %v17 = vld [vmem:[%s0 + $0x30] sm:$0xff]
  %v18 = vld [vmem:[%s0 + $0x38] sm:$0xff]
  %v19 = vld [vmem:[%s0 + $0x40] sm:$0xff]
  %v20 = vld [vmem:[%s0 + $0x48] sm:$0xff]
  %v21 = vld [vmem:[%s0 + $0x50] sm:$0xff]
  %v22 = vld [vmem:[%s0 + $0x58] sm:$0xff]
  %v23 = vld [vmem:[%s0 + $0x60] sm:$0xff]
  %v24 = vld [vmem:[%s0 + $0x68] sm:$0xff]
  %v25 = vld [vmem:[%s0 + $0x70] sm:$0xff]
  %v26 = vld [vmem:[%s0 + $0x78] sm:$0xff]
  %v27 = vld [vmem:[%s1] sm:$0xff]
  %v28 = vld [vmem:[%s1 + $0x8] sm:$0xff]
  %vm29 = vcmask 130048
  %v31 = vsel %vm29, %v11, 0
  %v34 = vsel %vm29, %v12, 0
  %v37 = vsel %vm29, %v13, 0
  %v40 = vsel %vm29, %v14, 0
  %v43 = vsel %vm29, %v15, 0
  %v46 = vsel %vm29, %v16, 0
  %v49 = vsel %vm29, %v17, 0
  %v52 = vsel %vm29, %v18, 0
  %v55 = vsel %vm29, %v19, 0
  %v58 = vsel %vm29, %v20, 0
  %v61 = vsel %vm29, %v21, 0
  %v64 = vsel %vm29, %v22, 0
  %v67 = vsel %vm29, %v23, 0
  %v70 = vsel %vm29, %v24, 0
  %v73 = vsel %vm29, %v25, 0
  %v76 = vsel %vm29, %v26, 0
  %78 = vmatprep.subr.mxu0 0.0
  %79 = vmatpush1.msra.mxu0 %v27
  %80 = vmatprep.subr.mxu0 0.0
  %81 = vmatpush1.msra.mxu0 %v28
  %82 = vmatprep.subr.mxu0 0.0
  %83 = vmatpush1.msra.mxu0 0.0
  %84 = vmatprep.subr.mxu0 0.0
  %85 = vmatpush1.msra.mxu0 0.0
  %86 = vmatprep.subr.mxu0 0.0
  %87 = vmatpush1.msra.mxu0 0.0
  %88 = vmatprep.subr.mxu0 0.0
  %89 = vmatpush1.msra.mxu0 0.0
  %90 = vmatprep.subr.mxu0 0.0
  %91 = vmatpush1.msra.mxu0 0.0
  %92 = vmatprep.subr.mxu0 0.0
  %93 = vmatpush1.msra.mxu0 0.0
  %94 = vmatprep.subr.mxu0 0.0
  %95 = vmatpush1.msra.mxu0 0.0
  %96 = vmatprep.subr.mxu0 0.0
  %97 = vmatpush1.msra.mxu0 0.0
  %98 = vmatprep.subr.mxu0 0.0
  %99 = vmatpush1.msra.mxu0 0.0
  %100 = vmatprep.subr.mxu0 0.0
  %101 = vmatpush1.msra.mxu0 0.0
  %102 = vmatprep.subr.mxu0 0.0
  %103 = vmatpush1.msra.mxu0 0.0
  %104 = vmatprep.subr.mxu0 0.0
  %105 = vmatpush1.msra.mxu0 0.0
  %106 = vmatprep.subr.mxu0 0.0
  %107 = vmatpush1.msra.mxu0 0.0
  %108 = vmatprep.subr.mxu0 0.0
  %109 = vmatpush1.msra.mxu0 0.0
  %110 = vmatprep.subr.mxu0 0.0
  %111 = vmatpush1.msra.mxu0 0.0
  %112 = vmatprep.subr.mxu0 0.0
  %113 = vmatpush1.msra.mxu0 0.0
  %114 = vmatprep.subr.mxu0 0.0
  %115 = vmatpush1.msra.mxu0 0.0
  %116 = vmatprep.subr.mxu0 0.0
  %117 = vmatpush1.msra.mxu0 0.0
  %118 = vmatprep.subr.mxu0 0.0
  %119 = vmatpush1.msra.mxu0 0.0
  %120 = vmatprep.subr.mxu0 0.0
  %121 = vmatpush1.msra.mxu0 0.0
  %122 = vmatprep.subr.mxu0 0.0
  %123 = vmatpush1.msra.mxu0 0.0
  %124 = vmatprep.subr.mxu0 0.0
  %125 = vmatpush1.msra.mxu0 0.0
  %126 = vmatprep.subr.mxu0 0.0
  %127 = vmatpush1.msra.mxu0 0.0
  %128 = vmatprep.subr.mxu0 0.0
  %129 = vmatpush1.msra.mxu0 0.0
  %130 = vmatprep.subr.mxu0 0.0
  %131 = vmatpush1.msra.mxu0 0.0
  %132 = vmatprep.subr.mxu0 0.0
  %133 = vmatpush1.msra.mxu0 0.0
  %134 = vmatprep.subr.mxu0 0.0
  %135 = vmatpush1.msra.mxu0 0.0
  %136 = vmatprep.subr.mxu0 0.0
  %137 = vmatpush1.msra.mxu0 0.0
  %138 = vmatprep.subr.mxu0 0.0
  %139 = vmatpush1.msra.mxu0 0.0
  %140 = vmatprep.subr.mxu0 0.0
  %141 = vmatpush1.msra.mxu0 0.0
  %142 = vmatprep.mubr.f32.mxu0 0.0
  %143 = vmatmul.mubr.f32.gmra.mrb[0].mxu0 %v31
  %v144 = vpop.f32.mrb[0].mxu0
  %v145 = vadd.f32 0.0, %v144
  %v146 = vpop.f32.mrb[0].mxu0
  %147 = vmatprep.mubr.f32.mxu0 0.0
  %148 = vmatmul.mubr.f32.gmra.mrb[0].mxu0 %v34
  %v149 = vpop.f32.mrb[0].mxu0
  %v150 = vadd.f32 0.0, %v149
  %v151 = vpop.f32.mrb[0].mxu0
  %152 = vmatprep.mubr.f32.mxu0 0.0
  %153 = vmatmul.mubr.f32.gmra.mrb[0].mxu0 %v37
  %v154 = vpop.f32.mrb[0].mxu0
  %v155 = vadd.f32 0.0, %v154
  %v156 = vpop.f32.mrb[0].mxu0
  %157 = vmatprep.mubr.f32.mxu0 0.0
  %158 = vmatmul.mubr.f32.gmra.mrb[0].mxu0 %v40
  %v159 = vpop.f32.mrb[0].mxu0
  %v160 = vadd.f32 0.0, %v159
  %v161 = vpop.f32.mrb[0].mxu0
  %162 = vmatprep.mubr.f32.mxu0 0.0
  %163 = vmatmul.mubr.f32.gmra.mrb[0].mxu0 %v43
  %v164 = vpop.f32.mrb[0].mxu0
  %v165 = vadd.f32 0.0, %v164
  %v166 = vpop.f32.mrb[0].mxu0
  %167 = vmatprep.mubr.f32.mxu0 0.0
  %168 = vmatmul.mubr.f32.gmra.mrb[0].mxu0 %v46
  %v169 = vpop.f32.mrb[0].mxu0
  %v170 = vadd.f32 0.0, %v169
  %v171 = vpop.f32.mrb[0].mxu0
  %172 = vmatprep.mubr.f32.mxu0 0.0
  %173 = vmatmul.mubr.f32.gmra.mrb[0].mxu0 %v49
  %v174 = vpop.f32.mrb[0].mxu0
  %v175 = vadd.f32 0.0, %v174
  %v176 = vpop.f32.mrb[0].mxu0
  %177 = vmatprep.mubr.f32.mxu0 0.0
  %178 = vmatmul.mubr.f32.gmra.mrb[0].mxu0 %v52
  %v179 = vpop.f32.mrb[0].mxu0
  %v180 = vadd.f32 0.0, %v179
  %v181 = vpop.f32.mrb[0].mxu0
  %182 = vmatprep.mubr.f32.mxu0 0.0
  %183 = vmatmul.mubr.f32.gmra.mrb[0].mxu0 %v55
  %v184 = vpop.f32.mrb[0].mxu0
  %v185 = vadd.f32 0.0, %v184
  %v186 = vpop.f32.mrb[0].mxu0
  %187 = vmatprep.mubr.f32.mxu0 0.0
  %188 = vmatmul.mubr.f32.gmra.mrb[0].mxu0 %v58
  %v189 = vpop.f32.mrb[0].mxu0
  %v190 = vadd.f32 0.0, %v189
  %v191 = vpop.f32.mrb[0].mxu0
  %192 = vmatprep.mubr.f32.mxu0 0.0
  %193 = vmatmul.mubr.f32.gmra.mrb[0].mxu0 %v61
  %v194 = vpop.f32.mrb[0].mxu0
  %v195 = vadd.f32 0.0, %v194
  %v196 = vpop.f32.mrb[0].mxu0
  %197 = vmatprep.mubr.f32.mxu0 0.0
  %198 = vmatmul.mubr.f32.gmra.mrb[0].mxu0 %v64
  %v199 = vpop.f32.mrb[0].mxu0
  %v200 = vadd.f32 0.0, %v199
  %v201 = vpop.f32.mrb[0].mxu0
  %202 = vmatprep.mubr.f32.mxu0 0.0
  %203 = vmatmul.mubr.f32.gmra.mrb[0].mxu0 %v67
  %v204 = vpop.f32.mrb[0].mxu0
  %v205 = vadd.f32 0.0, %v204
  %v206 = vpop.f32.mrb[0].mxu0
  %207 = vmatprep.mubr.f32.mxu0 0.0
  %208 = vmatmul.mubr.f32.gmra.mrb[0].mxu0 %v70
  %v209 = vpop.f32.mrb[0].mxu0
  %v210 = vadd.f32 0.0, %v209
  %v211 = vpop.f32.mrb[0].mxu0
  %212 = vmatprep.mubr.f32.mxu0 0.0
  %213 = vmatmul.mubr.f32.gmra.mrb[0].mxu0 %v73
  %v214 = vpop.f32.mrb[0].mxu0
  %v215 = vadd.f32 0.0, %v214
  %v216 = vpop.f32.mrb[0].mxu0
  %217 = vmatprep.mubr.f32.mxu0 0.0
  %218 = vmatmul.mubr.f32.gmra.mrb[0].mxu0 %v76
  %v219 = vpop.f32.mrb[0].mxu0
  %v220 = vadd.f32 0.0, %v219
  %v221 = vpop.f32.mrb[0].mxu0
  %222 = vdwg.mxu0
  %v223 = vmax.f32 %v145, 0.0
  %v224 = vmax.f32 %v150, 0.0
  %v225 = vmax.f32 %v155, 0.0
  %v226 = vmax.f32 %v160, 0.0
  %v227 = vmax.f32 %v165, 0.0
  %v228 = vmax.f32 %v170, 0.0
  %v229 = vmax.f32 %v175, 0.0
  %v230 = vmax.f32 %v180, 0.0
  %v231 = vmax.f32 %v185, 0.0
  %v232 = vmax.f32 %v190, 0.0
  %v233 = vmax.f32 %v195, 0.0
  %v234 = vmax.f32 %v200, 0.0
  %v235 = vmax.f32 %v205, 0.0
  %v236 = vmax.f32 %v210, 0.0
  %v237 = vmax.f32 %v215, 0.0
  %v238 = vmax.f32 %v220, 0.0
  %s239 = scalar_lea.vmem %s1, 16
  %v240 = vld [vmem:[%s239] sm:$0xff]
  %v241 = vld [vmem:[%s239 + $0x8] sm:$0xff]
  %v243 = vsel %vm29, %v223, 0
  %v246 = vsel %vm29, %v224, 0
  %v249 = vsel %vm29, %v225, 0
  %v252 = vsel %vm29, %v226, 0
  %v255 = vsel %vm29, %v227, 0
  %v258 = vsel %vm29, %v228, 0
  %v261 = vsel %vm29, %v229, 0
  %v264 = vsel %vm29, %v230, 0
  %v267 = vsel %vm29, %v231, 0
  %v270 = vsel %vm29, %v232, 0
  %v273 = vsel %vm29, %v233, 0
  %v276 = vsel %vm29, %v234, 0
  %v279 = vsel %vm29, %v235, 0
  %v282 = vsel %vm29, %v236, 0
  %v285 = vsel %vm29, %v237, 0
  %v288 = vsel %vm29, %v238, 0
  %290 = vmatprep.subr.mxu0 0.0
  %291 = vmatpush1.msra.mxu0 %v240
  %292 = vmatprep.subr.mxu0 0.0
  %293 = vmatpush1.msra.mxu0 %v241
  %294 = vmatprep.subr.mxu0 0.0
  %295 = vmatpush1.msra.mxu0 0.0
  %296 = vmatprep.subr.mxu0 0.0
  %297 = vmatpush1.msra.mxu0 0.0
  %298 = vmatprep.subr.mxu0 0.0
  %299 = vmatpush1.msra.mxu0 0.0
  %300 = vmatprep.subr.mxu0 0.0
  %301 = vmatpush1.msra.mxu0 0.0
  %302 = vmatprep.subr.mxu0 0.0
  %303 = vmatpush1.msra.mxu0 0.0
  %304 = vmatprep.subr.mxu0 0.0
  %305 = vmatpush1.msra.mxu0 0.0
  %306 = vmatprep.subr.mxu0 0.0
  %307 = vmatpush1.msra.mxu0 0.0
  %308 = vmatprep.subr.mxu0 0.0
  %309 = vmatpush1.msra.mxu0 0.0
  %310 = vmatprep.subr.mxu0 0.0
  %311 = vmatpush1.msra.mxu0 0.0
  %312 = vmatprep.subr.mxu0 0.0
  %313 = vmatpush1.msra.mxu0 0.0
  %314 = vmatprep.subr.mxu0 0.0
  %315 = vmatpush1.msra.mxu0 0.0
  %316 = vmatprep.subr.mxu0 0.0
  %317 = vmatpush1.msra.mxu0 0.0
  %318 = vmatprep.subr.mxu0 0.0
  %319 = vmatpush1.msra.mxu0 0.0
  %320 = vmatprep.subr.mxu0 0.0
  %321 = vmatpush1.msra.mxu0 0.0
  %322 = vmatprep.subr.mxu0 0.0
  %323 = vmatpush1.msra.mxu0 0.0
  %324 = vmatprep.subr.mxu0 0.0
  %325 = vmatpush1.msra.mxu0 0.0
  %326 = vmatprep.subr.mxu0 0.0
  %327 = vmatpush1.msra.mxu0 0.0
  %328 = vmatprep.subr.mxu0 0.0
  %329 = vmatpush1.msra.mxu0 0.0
  %330 = vmatprep.subr.mxu0 0.0
  %331 = vmatpush1.msra.mxu0 0.0
  %332 = vmatprep.subr.mxu0 0.0
  %333 = vmatpush1.msra.mxu0 0.0
  %334 = vmatprep.subr.mxu0 0.0
  %335 = vmatpush1.msra.mxu0 0.0
  %336 = vmatprep.subr.mxu0 0.0
  %337 = vmatpush1.msra.mxu0 0.0
  %338 = vmatprep.subr.mxu0 0.0
  %339 = vmatpush1.msra.mxu0 0.0
  %340 = vmatprep.subr.mxu0 0.0
  %341 = vmatpush1.msra.mxu0 0.0
  %342 = vmatprep.subr.mxu0 0.0
  %343 = vmatpush1.msra.mxu0 0.0
  %344 = vmatprep.subr.mxu0 0.0
  %345 = vmatpush1.msra.mxu0 0.0
  %346 = vmatprep.subr.mxu0 0.0
  %347 = vmatpush1.msra.mxu0 0.0
  %348 = vmatprep.subr.mxu0 0.0
  %349 = vmatpush1.msra.mxu0 0.0
  %350 = vmatprep.subr.mxu0 0.0
  %351 = vmatpush1.msra.mxu0 0.0
  %352 = vmatprep.subr.mxu0 0.0
  %353 = vmatpush1.msra.mxu0 0.0
  %354 = vmatprep.mubr.f32.mxu0 0.0
  %355 = vmatmul.mubr.f32.gmra.mrb[0].mxu0 %v243
  %v356 = vpop.f32.mrb[0].mxu0
  %v357 = vadd.f32 0.0, %v356
  %v358 = vpop.f32.mrb[0].mxu0
  %359 = vmatprep.mubr.f32.mxu0 0.0
  %360 = vmatmul.mubr.f32.gmra.mrb[0].mxu0 %v246
  %v361 = vpop.f32.mrb[0].mxu0
  %v362 = vadd.f32 0.0, %v361
  %v363 = vpop.f32.mrb[0].mxu0
  %364 = vmatprep.mubr.f32.mxu0 0.0
  %365 = vmatmul.mubr.f32.gmra.mrb[0].mxu0 %v249
  %v366 = vpop.f32.mrb[0].mxu0
  %v367 = vadd.f32 0.0, %v366
  %v368 = vpop.f32.mrb[0].mxu0
  %369 = vmatprep.mubr.f32.mxu0 0.0
  %370 = vmatmul.mubr.f32.gmra.mrb[0].mxu0 %v252
  %v371 = vpop.f32.mrb[0].mxu0
  %v372 = vadd.f32 0.0, %v371
  %v373 = vpop.f32.mrb[0].mxu0
  %374 = vmatprep.mubr.f32.mxu0 0.0
  %375 = vmatmul.mubr.f32.gmra.mrb[0].mxu0 %v255
  %v376 = vpop.f32.mrb[0].mxu0
  %v377 = vadd.f32 0.0, %v376
  %v378 = vpop.f32.mrb[0].mxu0
  %379 = vmatprep.mubr.f32.mxu0 0.0
  %380 = vmatmul.mubr.f32.gmra.mrb[0].mxu0 %v258
  %v381 = vpop.f32.mrb[0].mxu0
  %v382 = vadd.f32 0.0, %v381
  %v383 = vpop.f32.mrb[0].mxu0
  %384 = vmatprep.mubr.f32.mxu0 0.0
  %385 = vmatmul.mubr.f32.gmra.mrb[0].mxu0 %v261
  %v386 = vpop.f32.mrb[0].mxu0
  %v387 = vadd.f32 0.0, %v386
  %v388 = vpop.f32.mrb[0].mxu0
  %389 = vmatprep.mubr.f32.mxu0 0.0
  %390 = vmatmul.mubr.f32.gmra.mrb[0].mxu0 %v264
  %v391 = vpop.f32.mrb[0].mxu0
  %v392 = vadd.f32 0.0, %v391
  %v393 = vpop.f32.mrb[0].mxu0
  %394 = vmatprep.mubr.f32.mxu0 0.0
  %395 = vmatmul.mubr.f32.gmra.mrb[0].mxu0 %v267
  %v396 = vpop.f32.mrb[0].mxu0
  %v397 = vadd.f32 0.0, %v396
  %v398 = vpop.f32.mrb[0].mxu0
  %399 = vmatprep.mubr.f32.mxu0 0.0
  %400 = vmatmul.mubr.f32.gmra.mrb[0].mxu0 %v270
  %v401 = vpop.f32.mrb[0].mxu0
  %v402 = vadd.f32 0.0, %v401
  %v403 = vpop.f32.mrb[0].mxu0
  %404 = vmatprep.mubr.f32.mxu0 0.0
  %405 = vmatmul.mubr.f32.gmra.mrb[0].mxu0 %v273
  %v406 = vpop.f32.mrb[0].mxu0
  %v407 = vadd.f32 0.0, %v406
  %v408 = vpop.f32.mrb[0].mxu0
  %409 = vmatprep.mubr.f32.mxu0 0.0
  %410 = vmatmul.mubr.f32.gmra.mrb[0].mxu0 %v276
  %v411 = vpop.f32.mrb[0].mxu0
  %v412 = vadd.f32 0.0, %v411
  %v413 = vpop.f32.mrb[0].mxu0
  %414 = vmatprep.mubr.f32.mxu0 0.0
  %415 = vmatmul.mubr.f32.gmra.mrb[0].mxu0 %v279
  %v416 = vpop.f32.mrb[0].mxu0
  %v417 = vadd.f32 0.0, %v416
  %v418 = vpop.f32.mrb[0].mxu0
  %419 = vmatprep.mubr.f32.mxu0 0.0
  %420 = vmatmul.mubr.f32.gmra.mrb[0].mxu0 %v282
  %v421 = vpop.f32.mrb[0].mxu0
  %v422 = vadd.f32 0.0, %v421
  %v423 = vpop.f32.mrb[0].mxu0
  %424 = vmatprep.mubr.f32.mxu0 0.0
  %425 = vmatmul.mubr.f32.gmra.mrb[0].mxu0 %v285
  %v426 = vpop.f32.mrb[0].mxu0
  %v427 = vadd.f32 0.0, %v426
  %v428 = vpop.f32.mrb[0].mxu0
  %429 = vmatprep.mubr.f32.mxu0 0.0
  %430 = vmatmul.mubr.f32.gmra.mrb[0].mxu0 %v288
  %v431 = vpop.f32.mrb[0].mxu0
  %v432 = vadd.f32 0.0, %v431
  %v433 = vpop.f32.mrb[0].mxu0
  %434 = vdwg.mxu0
  %v435 = vmax.f32 %v357, 0.0
  %v436 = vmax.f32 %v362, 0.0
  %v437 = vmax.f32 %v367, 0.0
  %v438 = vmax.f32 %v372, 0.0
  %v439 = vmax.f32 %v377, 0.0
  %v440 = vmax.f32 %v382, 0.0
  %v441 = vmax.f32 %v387, 0.0
  %v442 = vmax.f32 %v392, 0.0
  %v443 = vmax.f32 %v397, 0.0
  %v444 = vmax.f32 %v402, 0.0
  %v445 = vmax.f32 %v407, 0.0
  %v446 = vmax.f32 %v412, 0.0
  %v447 = vmax.f32 %v417, 0.0
  %v448 = vmax.f32 %v422, 0.0
  %v449 = vmax.f32 %v427, 0.0
  %v450 = vmax.f32 %v432, 0.0
  %s451 = scalar_lea.vmem %s1, 32
  %v452 = vld [vmem:[%s451] sm:$0xff]
  %v453 = vld [vmem:[%s451 + $0x8] sm:$0xff]
  %v455 = vsel %vm29, %v435, 0
  %v458 = vsel %vm29, %v436, 0
  %v461 = vsel %vm29, %v437, 0
  %v464 = vsel %vm29, %v438, 0
  %v467 = vsel %vm29, %v439, 0
  %v470 = vsel %vm29, %v440, 0
  %v473 = vsel %vm29, %v441, 0
  %v476 = vsel %vm29, %v442, 0
  %v479 = vsel %vm29, %v443, 0
  %v482 = vsel %vm29, %v444, 0
  %v485 = vsel %vm29, %v445, 0
  %v488 = vsel %vm29, %v446, 0
  %v491 = vsel %vm29, %v447, 0
  %v494 = vsel %vm29, %v448, 0
  %v497 = vsel %vm29, %v449, 0
  %v500 = vsel %vm29, %v450, 0
  %502 = vmatprep.subr.mxu0 0.0
  %503 = vmatpush1.msra.mxu0 %v452
  %504 = vmatprep.subr.mxu0 0.0
  %505 = vmatpush1.msra.mxu0 %v453
  %506 = vmatprep.subr.mxu0 0.0
  %507 = vmatpush1.msra.mxu0 0.0
  %508 = vmatprep.subr.mxu0 0.0
  %509 = vmatpush1.msra.mxu0 0.0
  %510 = vmatprep.subr.mxu0 0.0
  %511 = vmatpush1.msra.mxu0 0.0
  %512 = vmatprep.subr.mxu0 0.0
  %513 = vmatpush1.msra.mxu0 0.0
  %514 = vmatprep.subr.mxu0 0.0
  %515 = vmatpush1.msra.mxu0 0.0
  %516 = vmatprep.subr.mxu0 0.0
  %517 = vmatpush1.msra.mxu0 0.0
  %518 = vmatprep.subr.mxu0 0.0
  %519 = vmatpush1.msra.mxu0 0.0
  %520 = vmatprep.subr.mxu0 0.0
  %521 = vmatpush1.msra.mxu0 0.0
  %522 = vmatprep.subr.mxu0 0.0
  %523 = vmatpush1.msra.mxu0 0.0
  %524 = vmatprep.subr.mxu0 0.0
  %525 = vmatpush1.msra.mxu0 0.0
  %526 = vmatprep.subr.mxu0 0.0
  %527 = vmatpush1.msra.mxu0 0.0
  %528 = vmatprep.subr.mxu0 0.0
  %529 = vmatpush1.msra.mxu0 0.0
  %530 = vmatprep.subr.mxu0 0.0
  %531 = vmatpush1.msra.mxu0 0.0
  %532 = vmatprep.subr.mxu0 0.0
  %533 = vmatpush1.msra.mxu0 0.0
  %534 = vmatprep.subr.mxu0 0.0
  %535 = vmatpush1.msra.mxu0 0.0
  %536 = vmatprep.subr.mxu0 0.0
  %537 = vmatpush1.msra.mxu0 0.0
  %538 = vmatprep.subr.mxu0 0.0
  %539 = vmatpush1.msra.mxu0 0.0
  %540 = vmatprep.subr.mxu0 0.0
  %541 = vmatpush1.msra.mxu0 0.0
  %542 = vmatprep.subr.mxu0 0.0
  %543 = vmatpush1.msra.mxu0 0.0
  %544 = vmatprep.subr.mxu0 0.0
  %545 = vmatpush1.msra.mxu0 0.0
  %546 = vmatprep.subr.mxu0 0.0
  %547 = vmatpush1.msra.mxu0 0.0
  %548 = vmatprep.subr.mxu0 0.0
  %549 = vmatpush1.msra.mxu0 0.0
  %550 = vmatprep.subr.mxu0 0.0
  %551 = vmatpush1.msra.mxu0 0.0
  %552 = vmatprep.subr.mxu0 0.0
  %553 = vmatpush1.msra.mxu0 0.0
  %554 = vmatprep.subr.mxu0 0.0
  %555 = vmatpush1.msra.mxu0 0.0
  %556 = vmatprep.subr.mxu0 0.0
  %557 = vmatpush1.msra.mxu0 0.0
  %558 = vmatprep.subr.mxu0 0.0
  %559 = vmatpush1.msra.mxu0 0.0
  %560 = vmatprep.subr.mxu0 0.0
  %561 = vmatpush1.msra.mxu0 0.0
  %562 = vmatprep.subr.mxu0 0.0
  %563 = vmatpush1.msra.mxu0 0.0
  %564 = vmatprep.subr.mxu0 0.0
  %565 = vmatpush1.msra.mxu0 0.0
  %566 = vmatprep.mubr.f32.mxu0 0.0
  %567 = vmatmul.mubr.f32.gmra.mrb[0].mxu0 %v455
  %v568 = vpop.f32.mrb[0].mxu0
  %v569 = vadd.f32 0.0, %v568
  %v570 = vpop.f32.mrb[0].mxu0
  %571 = vmatprep.mubr.f32.mxu0 0.0
  %572 = vmatmul.mubr.f32.gmra.mrb[0].mxu0 %v458
  %v573 = vpop.f32.mrb[0].mxu0
  %v574 = vadd.f32 0.0, %v573
  %v575 = vpop.f32.mrb[0].mxu0
  %576 = vmatprep.mubr.f32.mxu0 0.0
  %577 = vmatmul.mubr.f32.gmra.mrb[0].mxu0 %v461
  %v578 = vpop.f32.mrb[0].mxu0
  %v579 = vadd.f32 0.0, %v578
  %v580 = vpop.f32.mrb[0].mxu0
  %581 = vmatprep.mubr.f32.mxu0 0.0
  %582 = vmatmul.mubr.f32.gmra.mrb[0].mxu0 %v464
  %v583 = vpop.f32.mrb[0].mxu0
  %v584 = vadd.f32 0.0, %v583
  %v585 = vpop.f32.mrb[0].mxu0
  %586 = vmatprep.mubr.f32.mxu0 0.0
  %587 = vmatmul.mubr.f32.gmra.mrb[0].mxu0 %v467
  %v588 = vpop.f32.mrb[0].mxu0
  %v589 = vadd.f32 0.0, %v588
  %v590 = vpop.f32.mrb[0].mxu0
  %591 = vmatprep.mubr.f32.mxu0 0.0
  %592 = vmatmul.mubr.f32.gmra.mrb[0].mxu0 %v470
  %v593 = vpop.f32.mrb[0].mxu0
  %v594 = vadd.f32 0.0, %v593
  %v595 = vpop.f32.mrb[0].mxu0
  %596 = vmatprep.mubr.f32.mxu0 0.0
  %597 = vmatmul.mubr.f32.gmra.mrb[0].mxu0 %v473
  %v598 = vpop.f32.mrb[0].mxu0
  %v599 = vadd.f32 0.0, %v598
  %v600 = vpop.f32.mrb[0].mxu0
  %601 = vmatprep.mubr.f32.mxu0 0.0
  %602 = vmatmul.mubr.f32.gmra.mrb[0].mxu0 %v476
  %v603 = vpop.f32.mrb[0].mxu0
  %v604 = vadd.f32 0.0, %v603
  %v605 = vpop.f32.mrb[0].mxu0
  %606 = vmatprep.mubr.f32.mxu0 0.0
  %607 = vmatmul.mubr.f32.gmra.mrb[0].mxu0 %v479
  %v608 = vpop.f32.mrb[0].mxu0
  %v609 = vadd.f32 0.0, %v608
  %v610 = vpop.f32.mrb[0].mxu0
  %611 = vmatprep.mubr.f32.mxu0 0.0
  %612 = vmatmul.mubr.f32.gmra.mrb[0].mxu0 %v482
  %v613 = vpop.f32.mrb[0].mxu0
  %v614 = vadd.f32 0.0, %v613
  %v615 = vpop.f32.mrb[0].mxu0
  %616 = vmatprep.mubr.f32.mxu0 0.0
  %617 = vmatmul.mubr.f32.gmra.mrb[0].mxu0 %v485
  %v618 = vpop.f32.mrb[0].mxu0
  %v619 = vadd.f32 0.0, %v618
  %v620 = vpop.f32.mrb[0].mxu0
  %621 = vmatprep.mubr.f32.mxu0 0.0
  %622 = vmatmul.mubr.f32.gmra.mrb[0].mxu0 %v488
  %v623 = vpop.f32.mrb[0].mxu0
  %v624 = vadd.f32 0.0, %v623
  %v625 = vpop.f32.mrb[0].mxu0
  %626 = vmatprep.mubr.f32.mxu0 0.0
  %627 = vmatmul.mubr.f32.gmra.mrb[0].mxu0 %v491
  %v628 = vpop.f32.mrb[0].mxu0
  %v629 = vadd.f32 0.0, %v628
  %v630 = vpop.f32.mrb[0].mxu0
  %631 = vmatprep.mubr.f32.mxu0 0.0
  %632 = vmatmul.mubr.f32.gmra.mrb[0].mxu0 %v494
  %v633 = vpop.f32.mrb[0].mxu0
  %v634 = vadd.f32 0.0, %v633
  %v635 = vpop.f32.mrb[0].mxu0
  %636 = vmatprep.mubr.f32.mxu0 0.0
  %637 = vmatmul.mubr.f32.gmra.mrb[0].mxu0 %v497
  %v638 = vpop.f32.mrb[0].mxu0
  %v639 = vadd.f32 0.0, %v638
  %v640 = vpop.f32.mrb[0].mxu0
  %641 = vmatprep.mubr.f32.mxu0 0.0
  %642 = vmatmul.mubr.f32.gmra.mrb[0].mxu0 %v500
  %v643 = vpop.f32.mrb[0].mxu0
  %v644 = vadd.f32 0.0, %v643
  %v645 = vpop.f32.mrb[0].mxu0
  %646 = vdwg.mxu0
  %v647 = vmax.f32 %v569, 0.0
  %v648 = vmax.f32 %v574, 0.0
  %v649 = vmax.f32 %v579, 0.0
  %v650 = vmax.f32 %v584, 0.0
  %v651 = vmax.f32 %v589, 0.0
  %v652 = vmax.f32 %v594, 0.0
  %v653 = vmax.f32 %v599, 0.0
  %v654 = vmax.f32 %v604, 0.0
  %v655 = vmax.f32 %v609, 0.0
  %v656 = vmax.f32 %v614, 0.0
  %v657 = vmax.f32 %v619, 0.0
  %v658 = vmax.f32 %v624, 0.0
  %v659 = vmax.f32 %v629, 0.0
  %v660 = vmax.f32 %v634, 0.0
  %v661 = vmax.f32 %v639, 0.0
  %v662 = vmax.f32 %v644, 0.0
  %s663 = scalar_lea.vmem %s1, 48
  %v664 = vld [vmem:[%s663] sm:$0xff]
  %v665 = vld [vmem:[%s663 + $0x8] sm:$0xff]
  %v667 = vsel %vm29, %v647, 0
  %v670 = vsel %vm29, %v648, 0
  %v673 = vsel %vm29, %v649, 0
  %v676 = vsel %vm29, %v650, 0
  %v679 = vsel %vm29, %v651, 0
  %v682 = vsel %vm29, %v652, 0
  %v685 = vsel %vm29, %v653, 0
  %v688 = vsel %vm29, %v654, 0
  %v691 = vsel %vm29, %v655, 0
  %v694 = vsel %vm29, %v656, 0
  %v697 = vsel %vm29, %v657, 0
  %v700 = vsel %vm29, %v658, 0
  %v703 = vsel %vm29, %v659, 0
  %v706 = vsel %vm29, %v660, 0
  %v709 = vsel %vm29, %v661, 0
  %v712 = vsel %vm29, %v662, 0
  %714 = vmatprep.subr.mxu0 0.0
  %715 = vmatpush1.msra.mxu0 %v664
  %716 = vmatprep.subr.mxu0 0.0
  %717 = vmatpush1.msra.mxu0 %v665
  %718 = vmatprep.subr.mxu0 0.0
  %719 = vmatpush1.msra.mxu0 0.0
  %720 = vmatprep.subr.mxu0 0.0
  %721 = vmatpush1.msra.mxu0 0.0
  %722 = vmatprep.subr.mxu0 0.0
  %723 = vmatpush1.msra.mxu0 0.0
  %724 = vmatprep.subr.mxu0 0.0
  %725 = vmatpush1.msra.mxu0 0.0
  %726 = vmatprep.subr.mxu0 0.0
  %727 = vmatpush1.msra.mxu0 0.0
  %728 = vmatprep.subr.mxu0 0.0
  %729 = vmatpush1.msra.mxu0 0.0
  %730 = vmatprep.subr.mxu0 0.0
  %731 = vmatpush1.msra.mxu0 0.0
  %732 = vmatprep.subr.mxu0 0.0
  %733 = vmatpush1.msra.mxu0 0.0
  %734 = vmatprep.subr.mxu0 0.0
  %735 = vmatpush1.msra.mxu0 0.0
  %736 = vmatprep.subr.mxu0 0.0
  %737 = vmatpush1.msra.mxu0 0.0
  %738 = vmatprep.subr.mxu0 0.0
  %739 = vmatpush1.msra.mxu0 0.0
  %740 = vmatprep.subr.mxu0 0.0
  %741 = vmatpush1.msra.mxu0 0.0
  %742 = vmatprep.subr.mxu0 0.0
  %743 = vmatpush1.msra.mxu0 0.0
  %744 = vmatprep.subr.mxu0 0.0
  %745 = vmatpush1.msra.mxu0 0.0
  %746 = vmatprep.subr.mxu0 0.0
  %747 = vmatpush1.msra.mxu0 0.0
  %748 = vmatprep.subr.mxu0 0.0
  %749 = vmatpush1.msra.mxu0 0.0
  %750 = vmatprep.subr.mxu0 0.0
  %751 = vmatpush1.msra.mxu0 0.0
  %752 = vmatprep.subr.mxu0 0.0
  %753 = vmatpush1.msra.mxu0 0.0
  %754 = vmatprep.subr.mxu0 0.0
  %755 = vmatpush1.msra.mxu0 0.0
  %756 = vmatprep.subr.mxu0 0.0
  %757 = vmatpush1.msra.mxu0 0.0
  %758 = vmatprep.subr.mxu0 0.0
  %759 = vmatpush1.msra.mxu0 0.0
  %760 = vmatprep.subr.mxu0 0.0
  %761 = vmatpush1.msra.mxu0 0.0
  %762 = vmatprep.subr.mxu0 0.0
  %763 = vmatpush1.msra.mxu0 0.0
  %764 = vmatprep.subr.mxu0 0.0
  %765 = vmatpush1.msra.mxu0 0.0
  %766 = vmatprep.subr.mxu0 0.0
  %767 = vmatpush1.msra.mxu0 0.0
  %768 = vmatprep.subr.mxu0 0.0
  %769 = vmatpush1.msra.mxu0 0.0
  %770 = vmatprep.subr.mxu0 0.0
  %771 = vmatpush1.msra.mxu0 0.0
  %772 = vmatprep.subr.mxu0 0.0
  %773 = vmatpush1.msra.mxu0 0.0
  %774 = vmatprep.subr.mxu0 0.0
  %775 = vmatpush1.msra.mxu0 0.0
  %776 = vmatprep.subr.mxu0 0.0
  %777 = vmatpush1.msra.mxu0 0.0
  %778 = vmatprep.mubr.f32.mxu0 0.0
  %779 = vmatmul.mubr.f32.gmra.mrb[0].mxu0 %v667
  %v780 = vpop.f32.mrb[0].mxu0
  %v781 = vadd.f32 0.0, %v780
  %v782 = vpop.f32.mrb[0].mxu0
  %783 = vmatprep.mubr.f32.mxu0 0.0
  %784 = vmatmul.mubr.f32.gmra.mrb[0].mxu0 %v670
  %v785 = vpop.f32.mrb[0].mxu0
  %v786 = vadd.f32 0.0, %v785
  %v787 = vpop.f32.mrb[0].mxu0
  %788 = vmatprep.mubr.f32.mxu0 0.0
  %789 = vmatmul.mubr.f32.gmra.mrb[0].mxu0 %v673
  %v790 = vpop.f32.mrb[0].mxu0
  %v791 = vadd.f32 0.0, %v790
  %v792 = vpop.f32.mrb[0].mxu0
  %793 = vmatprep.mubr.f32.mxu0 0.0
  %794 = vmatmul.mubr.f32.gmra.mrb[0].mxu0 %v676
  %v795 = vpop.f32.mrb[0].mxu0
  %v796 = vadd.f32 0.0, %v795
  %v797 = vpop.f32.mrb[0].mxu0
  %798 = vmatprep.mubr.f32.mxu0 0.0
  %799 = vmatmul.mubr.f32.gmra.mrb[0].mxu0 %v679
  %v800 = vpop.f32.mrb[0].mxu0
  %v801 = vadd.f32 0.0, %v800
  %v802 = vpop.f32.mrb[0].mxu0
  %803 = vmatprep.mubr.f32.mxu0 0.0
  %804 = vmatmul.mubr.f32.gmra.mrb[0].mxu0 %v682
  %v805 = vpop.f32.mrb[0].mxu0
  %v806 = vadd.f32 0.0, %v805
  %v807 = vpop.f32.mrb[0].mxu0
  %808 = vmatprep.mubr.f32.mxu0 0.0
  %809 = vmatmul.mubr.f32.gmra.mrb[0].mxu0 %v685
  %v810 = vpop.f32.mrb[0].mxu0
  %v811 = vadd.f32 0.0, %v810
  %v812 = vpop.f32.mrb[0].mxu0
  %813 = vmatprep.mubr.f32.mxu0 0.0
  %814 = vmatmul.mubr.f32.gmra.mrb[0].mxu0 %v688
  %v815 = vpop.f32.mrb[0].mxu0
  %v816 = vadd.f32 0.0, %v815
  %v817 = vpop.f32.mrb[0].mxu0
  %818 = vmatprep.mubr.f32.mxu0 0.0
  %819 = vmatmul.mubr.f32.gmra.mrb[0].mxu0 %v691
  %v820 = vpop.f32.mrb[0].mxu0
  %v821 = vadd.f32 0.0, %v820
  %v822 = vpop.f32.mrb[0].mxu0
  %823 = vmatprep.mubr.f32.mxu0 0.0
  %824 = vmatmul.mubr.f32.gmra.mrb[0].mxu0 %v694
  %v825 = vpop.f32.mrb[0].mxu0
  %v826 = vadd.f32 0.0, %v825
  %v827 = vpop.f32.mrb[0].mxu0
  %828 = vmatprep.mubr.f32.mxu0 0.0
  %829 = vmatmul.mubr.f32.gmra.mrb[0].mxu0 %v697
  %v830 = vpop.f32.mrb[0].mxu0
  %v831 = vadd.f32 0.0, %v830
  %v832 = vpop.f32.mrb[0].mxu0
  %833 = vmatprep.mubr.f32.mxu0 0.0
  %834 = vmatmul.mubr.f32.gmra.mrb[0].mxu0 %v700
  %v835 = vpop.f32.mrb[0].mxu0
  %v836 = vadd.f32 0.0, %v835
  %v837 = vpop.f32.mrb[0].mxu0
  %838 = vmatprep.mubr.f32.mxu0 0.0
  %839 = vmatmul.mubr.f32.gmra.mrb[0].mxu0 %v703
  %v840 = vpop.f32.mrb[0].mxu0
  %v841 = vadd.f32 0.0, %v840
  %v842 = vpop.f32.mrb[0].mxu0
  %843 = vmatprep.mubr.f32.mxu0 0.0
  %844 = vmatmul.mubr.f32.gmra.mrb[0].mxu0 %v706
  %v845 = vpop.f32.mrb[0].mxu0
  %v846 = vadd.f32 0.0, %v845
  %v847 = vpop.f32.mrb[0].mxu0
  %848 = vmatprep.mubr.f32.mxu0 0.0
  %849 = vmatmul.mubr.f32.gmra.mrb[0].mxu0 %v709
  %v850 = vpop.f32.mrb[0].mxu0
  %v851 = vadd.f32 0.0, %v850
  %v852 = vpop.f32.mrb[0].mxu0
  %853 = vmatprep.mubr.f32.mxu0 0.0
  %854 = vmatmul.mubr.f32.gmra.mrb[0].mxu0 %v712
  %v855 = vpop.f32.mrb[0].mxu0
  %v856 = vadd.f32 0.0, %v855
  %v857 = vpop.f32.mrb[0].mxu0
  %858 = vdwg.mxu0
  %v859 = vmax.f32 %v781, 0.0
  %v860 = vmax.f32 %v786, 0.0
  %v861 = vmax.f32 %v791, 0.0
  %v862 = vmax.f32 %v796, 0.0
  %v863 = vmax.f32 %v801, 0.0
  %v864 = vmax.f32 %v806, 0.0
  %v865 = vmax.f32 %v811, 0.0
  %v866 = vmax.f32 %v816, 0.0
  %v867 = vmax.f32 %v821, 0.0
  %v868 = vmax.f32 %v826, 0.0
  %v869 = vmax.f32 %v831, 0.0
  %v870 = vmax.f32 %v836, 0.0
  %v871 = vmax.f32 %v841, 0.0
  %v872 = vmax.f32 %v846, 0.0
  %v873 = vmax.f32 %v851, 0.0
  %v874 = vmax.f32 %v856, 0.0
  %v875 = vlaneseq
  %v876 = vand.u32 %v875, 127
  %vm877 = vcmp.lt.s32.totalorder %v876, 5
  %v878 = vsel %vm877, %v859, 0.0
  %v879 = vsel %vm877, %v860, 0.0
  %v880 = vsel %vm877, %v861, 0.0
  %v881 = vsel %vm877, %v862, 0.0
  %v882 = vsel %vm877, %v863, 0.0
  %v883 = vsel %vm877, %v864, 0.0
  %v884 = vsel %vm877, %v865, 0.0
  %v885 = vsel %vm877, %v866, 0.0
  %v886 = vsel %vm877, %v867, 0.0
  %v887 = vsel %vm877, %v868, 0.0
  %v888 = vsel %vm877, %v869, 0.0
  %v889 = vsel %vm877, %v870, 0.0
  %v890 = vsel %vm877, %v871, 0.0
  %v891 = vsel %vm877, %v872, 0.0
  %v892 = vsel %vm877, %v873, 0.0
  %v893 = vsel %vm877, %v874, 0.0
  %v894 = vadd.f32 %v878, %v879
  %v895 = vadd.f32 %v894, %v880
  %v896 = vadd.f32 %v895, %v881
  %v897 = vadd.f32 %v896, %v882
  %v898 = vadd.f32 %v897, %v883
  %v899 = vadd.f32 %v898, %v884
  %v900 = vadd.f32 %v899, %v885
  %v901 = vadd.f32 %v900, %v886
  %v902 = vadd.f32 %v901, %v887
  %v903 = vadd.f32 %v902, %v888
  %v904 = vadd.f32 %v903, %v889
  %v905 = vadd.f32 %v904, %v890
  %v906 = vadd.f32 %v905, %v891
  %v907 = vadd.f32 %v906, %v892
  %v908 = vadd.f32 %v907, %v893
  %909 = vadd.xlane.f32.xlu0 %v908
  %v910 = vpop.xlane.xlu0 %909
  %v911 = vrot.slane %v910, 4
  %v912 = vadd.f32 %v910, %v911
  %v913 = vrot.slane %v912, 2
  %v914 = vadd.f32 %v912, %v913
  %v915 = vrot.slane %v914, 1
  %v916 = vadd.f32 %v914, %v915
  %s917 = vtos %v916
  %s918 = scalar_lea.vmem %s1, 64
  %v919 = vld [vmem:[%s918] sm:$0xff]
  %v920 = vld [vmem:[%s918 + $0x8] sm:$0xff]
  %v922 = vsel %vm29, %v859, 0
  %v925 = vsel %vm29, %v860, 0
  %v928 = vsel %vm29, %v861, 0
  %v931 = vsel %vm29, %v862, 0
  %v934 = vsel %vm29, %v863, 0
  %v937 = vsel %vm29, %v864, 0
  %v940 = vsel %vm29, %v865, 0
  %v943 = vsel %vm29, %v866, 0
  %v946 = vsel %vm29, %v867, 0
  %v949 = vsel %vm29, %v868, 0
  %v952 = vsel %vm29, %v869, 0
  %v955 = vsel %vm29, %v870, 0
  %v958 = vsel %vm29, %v871, 0
  %v961 = vsel %vm29, %v872, 0
  %v964 = vsel %vm29, %v873, 0
  %v967 = vsel %vm29, %v874, 0
  %969 = vmatprep.subr.mxu0 0.0
  %970 = vmatpush1.msra.mxu0 %v919
  %971 = vmatprep.subr.mxu0 0.0
  %972 = vmatpush1.msra.mxu0 %v920
  %973 = vmatprep.subr.mxu0 0.0
  %974 = vmatpush1.msra.mxu0 0.0
  %975 = vmatprep.subr.mxu0 0.0
  %976 = vmatpush1.msra.mxu0 0.0
  %977 = vmatprep.subr.mxu0 0.0
  %978 = vmatpush1.msra.mxu0 0.0
  %979 = vmatprep.subr.mxu0 0.0
  %980 = vmatpush1.msra.mxu0 0.0
  %981 = vmatprep.subr.mxu0 0.0
  %982 = vmatpush1.msra.mxu0 0.0
  %983 = vmatprep.subr.mxu0 0.0
  %984 = vmatpush1.msra.mxu0 0.0
  %985 = vmatprep.subr.mxu0 0.0
  %986 = vmatpush1.msra.mxu0 0.0
  %987 = vmatprep.subr.mxu0 0.0
  %988 = vmatpush1.msra.mxu0 0.0
  %989 = vmatprep.subr.mxu0 0.0
  %990 = vmatpush1.msra.mxu0 0.0
  %991 = vmatprep.subr.mxu0 0.0
  %992 = vmatpush1.msra.mxu0 0.0
  %993 = vmatprep.subr.mxu0 0.0
  %994 = vmatpush1.msra.mxu0 0.0
  %995 = vmatprep.subr.mxu0 0.0
  %996 = vmatpush1.msra.mxu0 0.0
  %997 = vmatprep.subr.mxu0 0.0
  %998 = vmatpush1.msra.mxu0 0.0
  %999 = vmatprep.subr.mxu0 0.0
  %1000 = vmatpush1.msra.mxu0 0.0
  %1001 = vmatprep.subr.mxu0 0.0
  %1002 = vmatpush1.msra.mxu0 0.0
  %1003 = vmatprep.subr.mxu0 0.0
  %1004 = vmatpush1.msra.mxu0 0.0
  %1005 = vmatprep.subr.mxu0 0.0
  %1006 = vmatpush1.msra.mxu0 0.0
  %1007 = vmatprep.subr.mxu0 0.0
  %1008 = vmatpush1.msra.mxu0 0.0
  %1009 = vmatprep.subr.mxu0 0.0
  %1010 = vmatpush1.msra.mxu0 0.0
  %1011 = vmatprep.subr.mxu0 0.0
  %1012 = vmatpush1.msra.mxu0 0.0
  %1013 = vmatprep.subr.mxu0 0.0
  %1014 = vmatpush1.msra.mxu0 0.0
  %1015 = vmatprep.subr.mxu0 0.0
  %1016 = vmatpush1.msra.mxu0 0.0
  %1017 = vmatprep.subr.mxu0 0.0
  %1018 = vmatpush1.msra.mxu0 0.0
  %1019 = vmatprep.subr.mxu0 0.0
  %1020 = vmatpush1.msra.mxu0 0.0
  %1021 = vmatprep.subr.mxu0 0.0
  %1022 = vmatpush1.msra.mxu0 0.0
  %1023 = vmatprep.subr.mxu0 0.0
  %1024 = vmatpush1.msra.mxu0 0.0
  %1025 = vmatprep.subr.mxu0 0.0
  %1026 = vmatpush1.msra.mxu0 0.0
  %1027 = vmatprep.subr.mxu0 0.0
  %1028 = vmatpush1.msra.mxu0 0.0
  %1029 = vmatprep.subr.mxu0 0.0
  %1030 = vmatpush1.msra.mxu0 0.0
  %1031 = vmatprep.subr.mxu0 0.0
  %1032 = vmatpush1.msra.mxu0 0.0
  %1033 = vmatprep.mubr.f32.mxu0 0.0
  %1034 = vmatmul.mubr.f32.gmra.mrb[0].mxu0 %v922
  %v1035 = vpop.f32.mrb[0].mxu0
  %v1036 = vadd.f32 0.0, %v1035
  %v1037 = vpop.f32.mrb[0].mxu0
  %1038 = vmatprep.mubr.f32.mxu0 0.0
  %1039 = vmatmul.mubr.f32.gmra.mrb[0].mxu0 %v925
  %v1040 = vpop.f32.mrb[0].mxu0
  %v1041 = vadd.f32 0.0, %v1040
  %v1042 = vpop.f32.mrb[0].mxu0
  %1043 = vmatprep.mubr.f32.mxu0 0.0
  %1044 = vmatmul.mubr.f32.gmra.mrb[0].mxu0 %v928
  %v1045 = vpop.f32.mrb[0].mxu0
  %v1046 = vadd.f32 0.0, %v1045
  %v1047 = vpop.f32.mrb[0].mxu0
  %1048 = vmatprep.mubr.f32.mxu0 0.0
  %1049 = vmatmul.mubr.f32.gmra.mrb[0].mxu0 %v931
  %v1050 = vpop.f32.mrb[0].mxu0
  %v1051 = vadd.f32 0.0, %v1050
  %v1052 = vpop.f32.mrb[0].mxu0
  %1053 = vmatprep.mubr.f32.mxu0 0.0
  %1054 = vmatmul.mubr.f32.gmra.mrb[0].mxu0 %v934
  %v1055 = vpop.f32.mrb[0].mxu0
  %v1056 = vadd.f32 0.0, %v1055
  %v1057 = vpop.f32.mrb[0].mxu0
  %1058 = vmatprep.mubr.f32.mxu0 0.0
  %1059 = vmatmul.mubr.f32.gmra.mrb[0].mxu0 %v937
  %v1060 = vpop.f32.mrb[0].mxu0
  %v1061 = vadd.f32 0.0, %v1060
  %v1062 = vpop.f32.mrb[0].mxu0
  %1063 = vmatprep.mubr.f32.mxu0 0.0
  %1064 = vmatmul.mubr.f32.gmra.mrb[0].mxu0 %v940
  %v1065 = vpop.f32.mrb[0].mxu0
  %v1066 = vadd.f32 0.0, %v1065
  %v1067 = vpop.f32.mrb[0].mxu0
  %1068 = vmatprep.mubr.f32.mxu0 0.0
  %1069 = vmatmul.mubr.f32.gmra.mrb[0].mxu0 %v943
  %v1070 = vpop.f32.mrb[0].mxu0
  %v1071 = vadd.f32 0.0, %v1070
  %v1072 = vpop.f32.mrb[0].mxu0
  %1073 = vmatprep.mubr.f32.mxu0 0.0
  %1074 = vmatmul.mubr.f32.gmra.mrb[0].mxu0 %v946
  %v1075 = vpop.f32.mrb[0].mxu0
  %v1076 = vadd.f32 0.0, %v1075
  %v1077 = vpop.f32.mrb[0].mxu0
  %1078 = vmatprep.mubr.f32.mxu0 0.0
  %1079 = vmatmul.mubr.f32.gmra.mrb[0].mxu0 %v949
  %v1080 = vpop.f32.mrb[0].mxu0
  %v1081 = vadd.f32 0.0, %v1080
  %v1082 = vpop.f32.mrb[0].mxu0
  %1083 = vmatprep.mubr.f32.mxu0 0.0
  %1084 = vmatmul.mubr.f32.gmra.mrb[0].mxu0 %v952
  %v1085 = vpop.f32.mrb[0].mxu0
  %v1086 = vadd.f32 0.0, %v1085
  %v1087 = vpop.f32.mrb[0].mxu0
  %1088 = vmatprep.mubr.f32.mxu0 0.0
  %1089 = vmatmul.mubr.f32.gmra.mrb[0].mxu0 %v955
  %v1090 = vpop.f32.mrb[0].mxu0
  %v1091 = vadd.f32 0.0, %v1090
  %v1092 = vpop.f32.mrb[0].mxu0
  %1093 = vmatprep.mubr.f32.mxu0 0.0
  %1094 = vmatmul.mubr.f32.gmra.mrb[0].mxu0 %v958
  %v1095 = vpop.f32.mrb[0].mxu0
  %v1096 = vadd.f32 0.0, %v1095
  %v1097 = vpop.f32.mrb[0].mxu0
  %1098 = vmatprep.mubr.f32.mxu0 0.0
  %1099 = vmatmul.mubr.f32.gmra.mrb[0].mxu0 %v961
  %v1100 = vpop.f32.mrb[0].mxu0
  %v1101 = vadd.f32 0.0, %v1100
  %v1102 = vpop.f32.mrb[0].mxu0
  %1103 = vmatprep.mubr.f32.mxu0 0.0
  %1104 = vmatmul.mubr.f32.gmra.mrb[0].mxu0 %v964
  %v1105 = vpop.f32.mrb[0].mxu0
  %v1106 = vadd.f32 0.0, %v1105
  %v1107 = vpop.f32.mrb[0].mxu0
  %1108 = vmatprep.mubr.f32.mxu0 0.0
  %1109 = vmatmul.mubr.f32.gmra.mrb[0].mxu0 %v967
  %v1110 = vpop.f32.mrb[0].mxu0
  %v1111 = vadd.f32 0.0, %v1110
  %v1112 = vpop.f32.mrb[0].mxu0
  %1113 = vdwg.mxu0
  %s1114 = smul.f32 %s917, 0.1
  %v1115 = vstv %s1114
  %v1116 = vmul.f32 %v1115, %v920
  %v1117 = vlaneseq
  %v1118 = vshrl.u32 %v1117, 7
  %v1119 = vsub.s32 0, %v1118
  %v1120 = vrot.slane %v1116, %v1119
  %v1121 = vsub.f32 %v1036, %v1120
  %v1122 = vsub.f32 %v1041, %v1120
  %v1123 = vsub.f32 %v1046, %v1120
  %v1124 = vsub.f32 %v1051, %v1120
  %v1125 = vsub.f32 %v1056, %v1120
  %v1126 = vsub.f32 %v1061, %v1120
  %v1127 = vsub.f32 %v1066, %v1120
  %v1128 = vsub.f32 %v1071, %v1120
  %v1129 = vsub.f32 %v1076, %v1120
  %v1130 = vsub.f32 %v1081, %v1120
  %v1131 = vsub.f32 %v1086, %v1120
  %v1132 = vsub.f32 %v1091, %v1120
  %v1133 = vsub.f32 %v1096, %v1120
  %v1134 = vsub.f32 %v1101, %v1120
  %v1135 = vsub.f32 %v1106, %v1120
  %v1136 = vsub.f32 %v1111, %v1120
  %1137 = vst [vmem:[%s2] sm:$0xff] %v1121
  %1138 = vst [vmem:[%s2 + $0x8] sm:$0xff] %v1122
  %1139 = vst [vmem:[%s2 + $0x10] sm:$0xff] %v1123
  %1140 = vst [vmem:[%s2 + $0x18] sm:$0xff] %v1124
  %1141 = vst [vmem:[%s2 + $0x20] sm:$0xff] %v1125
  %1142 = vst [vmem:[%s2 + $0x28] sm:$0xff] %v1126
  %1143 = vst [vmem:[%s2 + $0x30] sm:$0xff] %v1127
  %1144 = vst [vmem:[%s2 + $0x38] sm:$0xff] %v1128
  %1145 = vst [vmem:[%s2 + $0x40] sm:$0xff] %v1129
  %1146 = vst [vmem:[%s2 + $0x48] sm:$0xff] %v1130
  %1147 = vst [vmem:[%s2 + $0x50] sm:$0xff] %v1131
  %1148 = vst [vmem:[%s2 + $0x58] sm:$0xff] %v1132
  %1149 = vst [vmem:[%s2 + $0x60] sm:$0xff] %v1133
  %1150 = vst [vmem:[%s2 + $0x68] sm:$0xff] %v1134
  %1151 = vst [vmem:[%s2 + $0x70] sm:$0xff] %v1135
  %1152 = vst [vmem:[%s2 + $0x78] sm:$0xff] %v1136
  // Predicated region
  $region10: #{dueling_dqn_forward.1} parent=0 // pred_check
    _
  $region11: #{dueling_dqn_forward.1} parent=0 // pred_check_branch
    %1154 = sbr.rel (0) target = $region13
  $region12: #{dueling_dqn_forward.1} parent=0 // pred_region
    _
  $region13: #{dueling_dqn_forward.1} parent=0 // pred_fallthru
    _
  // Predicated region
  $region14: #{dueling_dqn_forward.1} parent=0 // pred_check
    _
  $region15: #{dueling_dqn_forward.1} parent=0 // pred_check_branch
    %1156 = sbr.rel (0) target = $region17
  $region16: #{dueling_dqn_forward.1} parent=0 // pred_region
    _
  $region17: #{dueling_dqn_forward.1} parent=0 // pred_fallthru
    _

</llo_original>
